<compile_context>
chip_gen: v7x
topology: tpu7x:2x2x1
jax: 0.10.0
libtpu: 0.0.40
codegen_flags: <defaults>
</compile_context>

<pallas_src>
import functools

import jax
import jax.numpy as jnp
from jax.experimental import pallas as pl
from jax.experimental.pallas import tpu as pltpu


_MIB = 1024 * 1024
_VMEM_LIMIT = 40 * _MIB          # raised scoped-VMEM limit; < v7x's 64 MiB physical
_FUSED_BLOCK_BUDGET = 4 * _MIB   # f32-equivalent bytes for the resident (Bt, C, L) block
_STREAM_TILE_BUDGET = 4 * _MIB   # bytes per streaming tile in the two-pass fallback


def _compiler_params(semantics):
    return pltpu.CompilerParams(dimension_semantics=semantics,
                                vmem_limit_bytes=_VMEM_LIMIT)


def _pick_tile(full, base, cap):
    """Largest divisor of `full` that is a multiple of `base` and <= cap.

    Falls back to the full extent (always a legal TPU block) if no such divisor
    exists or the full extent already fits under the cap.
    """
    cap = max(base, min(cap, full))
    if full <= cap:
        return full
    k = cap // base
    while k >= 1:
        t = k * base
        if full % t == 0:
            return t
        k -= 1
    return full


def _largest_divisor_leq(n, cap):
    cap = max(1, min(cap, n))
    for d in range(cap, 0, -1):
        if n % d == 0:
            return d
    return 1


# ---------------------------------------------------------------------------
# Fused single-pass kernel: reduce over L + excitation MLP + gated multiply on
# one resident (Bt, C, L) block.  x is read once and written once.
# ---------------------------------------------------------------------------
def _fused_se_kernel(x_ref, w1_ref, b1_ref, w2_ref, b2_ref, o_ref, *, inv_l):
    xf = x_ref[...].astype(jnp.float32)                              # (Bt, C, L)
    mean = jnp.sum(xf, axis=-1) * inv_l                              # (Bt, C)
    h = jnp.dot(mean, w1_ref[...],
                preferred_element_type=jnp.float32) + b1_ref[...]
    h = jnp.maximum(h, 0.0)                                          # ReLU
    z = jnp.dot(h, w2_ref[...],
                preferred_element_type=jnp.float32) + b2_ref[...]
    # Numerically stable sigmoid; residual folded in: gate = sigmoid(z) + 1.
    ez = jnp.exp(-jnp.abs(z))
    sig = jnp.where(z >= 0.0, 1.0 / (1.0 + ez), ez / (1.0 + ez))
    gate = (sig + 1.0)[..., None]                                    # (Bt, C, 1)
    # Multiply in f32, cast only at the store (exact also for bf16 inputs).
    o_ref[...] = (xf * gate).astype(o_ref.dtype)


# ---------------------------------------------------------------------------
# Fallback phase 1: row sums over L.  Per-lane partial sums (VPU adds) per
# step; the single cross-lane reduce happens only at finalize (keeps the XLU
# off the per-step critical path, relevant at v7x bandwidth).
# ---------------------------------------------------------------------------
def _rowsum_kernel(x_ref, sum_ref, acc_ref, *, lane_chunks):
    l = pl.program_id(1)

    @pl.when(l == 0)
    def _():
        acc_ref[...] = jnp.zeros_like(acc_ref)

    xf = x_ref[...].astype(jnp.float32)                              # (Rt, Lt)
    if lane_chunks > 0:
        acc = acc_ref[...]
        for k in range(lane_chunks):                                 # static unroll
            acc = acc + xf[:, k * 128:(k + 1) * 128]
        acc_ref[...] = acc
    else:
        acc_ref[...] += jnp.sum(xf, axis=-1, keepdims=True)

    @pl.when(l == pl.num_programs(1) - 1)
    def _():
        sum_ref[...] = jnp.sum(acc_ref[...], axis=-1, keepdims=True)


# ---------------------------------------------------------------------------
# Fallback phase 2: lane-dense streaming apply, out = x * gate (residual is
# already folded into the gate).  Multiply in f32, cast at the store.
# ---------------------------------------------------------------------------
def _apply_gate_kernel(x_ref, g_ref, o_ref):
    o_ref[...] = (x_ref[...].astype(jnp.float32) * g_ref[...]).astype(o_ref.dtype)


def residual_se_block(x, w1, b1, w2, b2, *, force_two_pass=False,
                      max_tile_bytes=None):
    """x: (B, C, L). w1: (C, mid) = fc1.weight^T, b1: (mid,),
    w2: (mid, C) = fc2.weight^T, b2: (C,)."""
    B, C, L = x.shape
    mid = w1.shape[1]
    itemsize = jnp.dtype(x.dtype).itemsize
    sub = max(8, 32 // itemsize)       # sublane granularity: 8 f32 / 16 bf16 / 32 int8

    fused_budget = _FUSED_BLOCK_BUDGET if max_tile_bytes is None else max_tile_bytes
    stream_budget = _STREAM_TILE_BUDGET if max_tile_bytes is None else max_tile_bytes

    # ------------------ Fused single-pass path (preferred) ------------------
    block_f32_bytes = C * L * 4        # f32-equivalent bytes of a Bt=1 block
    if (not force_two_pass) and block_f32_bytes <= fused_budget:
        bt_cap = max(1, fused_budget // block_f32_bytes)
        if B >= 2:
            # Keep >=2 blocks on the parallel axis (v7x has 2 TensorCores).
            bt_cap = min(bt_cap, B // 2)
        Bt = _largest_divisor_leq(B, bt_cap)

        out = pl.pallas_call(
            functools.partial(_fused_se_kernel, inv_l=1.0 / L),
            out_shape=jax.ShapeDtypeStruct((B, C, L), x.dtype),
            grid=(B // Bt,),
            in_specs=[
                pl.BlockSpec((Bt, C, L), lambda b: (b, 0, 0)),   # resident x block
                pl.BlockSpec((C, mid), lambda b: (0, 0)),        # W1^T
                pl.BlockSpec((1, mid), lambda b: (0, 0)),        # b1
                pl.BlockSpec((mid, C), lambda b: (0, 0)),        # W2^T
                pl.BlockSpec((1, C), lambda b: (0, 0)),          # b2
            ],
            out_specs=pl.BlockSpec((Bt, C, L), lambda b: (b, 0, 0)),
            input_output_aliases={0: 0},                         # reuse x's HBM buffer
            compiler_params=_compiler_params(("parallel",)),
        )(x, w1, b1.reshape(1, mid), w2, b2.reshape(1, C))
        return out

    # ------------------------- Two-pass fallback ----------------------------
    rows = B * C
    x2 = x.reshape(rows, L)

    # Row tile: divisor of rows, multiple of the sublane granularity, capped so
    # the parallel axis keeps >=2 blocks when possible.
    row_cap = 512
    if rows >= 2 * sub:
        row_cap = min(row_cap, rows // 2)
    Rt = _pick_tile(rows, sub, row_cap)
    # Lane tile: multiple of 128 dividing L (lane-dense output), sized so
    # Rt * Lt stays under the streaming-tile budget.
    Lt = _pick_tile(L, 128, max(128, stream_budget // max(1, Rt * itemsize)))
    lane_chunks = (Lt // 128) if (Lt % 128 == 0) else 0
    acc_shape = (Rt, 128) if lane_chunks > 0 else (Rt, 1)

    # Phase 1: per-row sums of x over L.
    sums = pl.pallas_call(
        functools.partial(_rowsum_kernel, lane_chunks=lane_chunks),
        out_shape=jax.ShapeDtypeStruct((rows, 1), jnp.float32),
        grid=(rows // Rt, L // Lt),
        in_specs=[pl.BlockSpec((Rt, Lt), lambda r, l: (r, l))],
        out_specs=pl.BlockSpec((Rt, 1), lambda r, l: (r, 0)),
        scratch_shapes=[pltpu.VMEM(acc_shape, jnp.float32)],
        compiler_params=_compiler_params(("parallel", "arbitrary")),
    )(x2)

    # Tiny excitation MLP in plain XLA (O(B*C*mid) flops); residual folded in.
    mean = sums.reshape(B, C) * jnp.float32(1.0 / L)
    h = jnp.maximum(mean @ w1.astype(jnp.float32) + b1.astype(jnp.float32), 0.0)
    z = h @ w2.astype(jnp.float32) + b2.astype(jnp.float32)
    gate = (jax.nn.sigmoid(z) + 1.0).reshape(rows, 1)            # f32, (B*C, 1)

    # Phase 2: lane-dense streaming apply, out = x * gate.
    out2 = pl.pallas_call(
        _apply_gate_kernel,
        out_shape=jax.ShapeDtypeStruct((rows, L), x.dtype),
        grid=(rows // Rt, L // Lt),
        in_specs=[
            pl.BlockSpec((Rt, Lt), lambda r, l: (r, l)),         # x tile
            pl.BlockSpec((Rt, 1), lambda r, l: (r, 0)),          # per-row gate
        ],
        out_specs=pl.BlockSpec((Rt, Lt), lambda r, l: (r, l)),
        input_output_aliases={0: 0},                             # reuse x2's HBM buffer
        compiler_params=_compiler_params(("parallel", "parallel")),
    )(x2, gate)

    return out2.reshape(B, C, L)


def _reference(x, w1, b1, w2, b2):
    xf = x.astype(jnp.float32)
    y = jnp.mean(xf, axis=-1)
    y = jnp.maximum(y @ w1.astype(jnp.float32) + b1.astype(jnp.float32), 0.0)
    s = jax.nn.sigmoid(y @ w2.astype(jnp.float32) + b2.astype(jnp.float32))[..., None]
    return xf * s + xf


def _make_params(key, c, mid):
    kw1, kb1, kw2, kb2 = jax.random.split(key, 4)
    lim1 = 1.0 / jnp.sqrt(jnp.float32(c))
    lim2 = 1.0 / jnp.sqrt(jnp.float32(mid))
    w1 = jax.random.uniform(kw1, (c, mid), jnp.float32, -lim1, lim1)   # fc1.weight^T
    b1 = jax.random.uniform(kb1, (mid,), jnp.float32, -lim1, lim1)     # fc1.bias
    w2 = jax.random.uniform(kw2, (mid, c), jnp.float32, -lim2, lim2)   # fc2.weight^T
    b2 = jax.random.uniform(kb2, (c,), jnp.float32, -lim2, lim2)       # fc2.bias
    return w1, b1, w2, b2


if __name__ == "__main__":
    key = jax.random.PRNGKey(0)
    k1, k2, kp1, kp2 = jax.random.split(key, 4)

    # ---- Test 1: fused single-pass path (f32, small shapes, module default mid=30)
    B, C, L, MID = 2, 4, 16, 30
    x = jax.random.normal(k1, (B, C, L), dtype=jnp.float32)
    w1, b1, w2, b2 = _make_params(kp1, C, MID)
    ref = _reference(x, w1, b1, w2, b2)                          # compute ref first
    out = jax.block_until_ready(residual_se_block(x, w1, b1, w2, b2))
    assert out.shape == (B, C, L)
    assert jnp.allclose(out, ref, atol=1e-5, rtol=1e-5), "fused path mismatch"

    # ---- Test 2: two-pass fallback (bf16, multi-tile accumulation over L)
    B2, C2, L2 = 4, 8, 512
    xb = jax.random.normal(k2, (B2, C2, L2), dtype=jnp.float32).astype(jnp.bfloat16)
    w1b, b1b, w2b, b2b = _make_params(kp2, C2, MID)
    ref2 = _reference(xb, w1b, b1b, w2b, b2b)                    # f32 reference
    out2 = jax.block_until_ready(
        residual_se_block(xb, w1b, b1b, w2b, b2b,
                          force_two_pass=True, max_tile_bytes=8 * 1024))
    assert out2.shape == (B2, C2, L2) and out2.dtype == jnp.bfloat16
    assert jnp.allclose(out2.astype(jnp.float32), ref2, atol=2e-2, rtol=2e-2), \
        "two-pass path mismatch"

    print("KERNEL_OK")
</pallas_src>

<mosaic_0001>
module attributes {stable_mosaic.version = 11 : i64} {
  func.func @_fused_se_kernel(%arg0: i32, %arg1: memref<1x4x16xf32, #tpu.memory_space<vmem>>, %arg2: memref<4x30xf32, #tpu.memory_space<vmem>>, %arg3: memref<1x30xf32, #tpu.memory_space<vmem>>, %arg4: memref<30x4xf32, #tpu.memory_space<vmem>>, %arg5: memref<1x4xf32, #tpu.memory_space<vmem>>, %arg6: memref<1x4x16xf32, #tpu.memory_space<vmem>>) attributes {dimension_semantics = [#tpu.dimension_semantics<parallel>], iteration_bounds = array<i64: 2>, scalar_prefetch = 0 : i64, scratch_operands = 0 : i64, tpu.core_type = #tpu.core_type<tc>, window_params = [{transform_indices = @transform_0, window_bounds = array<i64: 1, 4, 16>}, {pipeline_mode = #tpu.pipeline_mode<synchronous>, transform_indices = @transform_1, window_bounds = array<i64: 4, 30>}, {pipeline_mode = #tpu.pipeline_mode<synchronous>, transform_indices = @transform_2, window_bounds = array<i64: 1, 30>}, {pipeline_mode = #tpu.pipeline_mode<synchronous>, transform_indices = @transform_3, window_bounds = array<i64: 30, 4>}, {pipeline_mode = #tpu.pipeline_mode<synchronous>, transform_indices = @transform_4, window_bounds = array<i64: 1, 4>}, {transform_indices = @transform_5, window_bounds = array<i64: 1, 4, 16>}]} {
    %c0 = arith.constant 0 : index
    %c0_0 = arith.constant 0 : index
    %c0_1 = arith.constant 0 : index
    %0 = vector.load %arg1[%c0, %c0_0, %c0_1] : memref<1x4x16xf32, #tpu.memory_space<vmem>>, vector<1x4x16xf32>
    %cst = arith.constant dense<0.000000e+00> : vector<1x4xf32>
    %1 = vector.multi_reduction <add>, %0, %cst [2] : vector<1x4x16xf32> to vector<1x4xf32>
    %cst_2 = arith.constant 6.250000e-02 : f32
    %2 = vector.broadcast %cst_2 : f32 to vector<1x4xf32>
    %3 = arith.mulf %1, %2 : vector<1x4xf32>
    %c0_3 = arith.constant 0 : index
    %c0_4 = arith.constant 0 : index
    %4 = vector.load %arg2[%c0_3, %c0_4] : memref<4x30xf32, #tpu.memory_space<vmem>>, vector<4x30xf32>
    %cst_5 = arith.constant dense<0.000000e+00> : vector<1x30xf32>
    %5 = tpu.matmul %3, %4, %cst_5 {dimension_numbers = #tpu.dot_dimension_numbers<[1], [0], [0], [1], [0, 0, 1, 1], [], []>} : vector<1x4xf32>, vector<4x30xf32>, vector<1x30xf32> -> vector<1x30xf32>
    %c0_6 = arith.constant 0 : index
    %c0_7 = arith.constant 0 : index
    %6 = vector.load %arg3[%c0_6, %c0_7] : memref<1x30xf32, #tpu.memory_space<vmem>>, vector<1x30xf32>
    %7 = arith.addf %5, %6 : vector<1x30xf32>
    %cst_8 = arith.constant 0.000000e+00 : f32
    %8 = vector.broadcast %cst_8 : f32 to vector<1x30xf32>
    %9 = arith.maximumf %7, %8 : vector<1x30xf32>
    %c0_9 = arith.constant 0 : index
    %c0_10 = arith.constant 0 : index
    %10 = vector.load %arg4[%c0_9, %c0_10] : memref<30x4xf32, #tpu.memory_space<vmem>>, vector<30x4xf32>
    %cst_11 = arith.constant dense<0.000000e+00> : vector<1x4xf32>
    %11 = tpu.matmul %9, %10, %cst_11 {dimension_numbers = #tpu.dot_dimension_numbers<[1], [0], [0], [1], [0, 0, 1, 1], [], []>} : vector<1x30xf32>, vector<30x4xf32>, vector<1x4xf32> -> vector<1x4xf32>
    %c0_12 = arith.constant 0 : index
    %c0_13 = arith.constant 0 : index
    %12 = vector.load %arg5[%c0_12, %c0_13] : memref<1x4xf32, #tpu.memory_space<vmem>>, vector<1x4xf32>
    %13 = arith.addf %11, %12 : vector<1x4xf32>
    %14 = math.absf %13 : vector<1x4xf32>
    %cst_14 = arith.constant 0.000000e+00 : f32
    %15 = vector.broadcast %cst_14 : f32 to vector<1x4xf32>
    %16 = arith.subf %15, %14 : vector<1x4xf32>
    %17 = math.exp %16 : vector<1x4xf32>
    %cst_15 = arith.constant 0.000000e+00 : f32
    %18 = vector.broadcast %cst_15 : f32 to vector<1x4xf32>
    %19 = arith.cmpf oge, %13, %18 : vector<1x4xf32>
    %cst_16 = arith.constant 1.000000e+00 : f32
    %20 = vector.broadcast %cst_16 : f32 to vector<1x4xf32>
    %21 = arith.addf %20, %17 : vector<1x4xf32>
    %cst_17 = arith.constant 1.000000e+00 : f32
    %22 = vector.broadcast %cst_17 : f32 to vector<1x4xf32>
    %23 = arith.divf %22, %21 : vector<1x4xf32>
    %cst_18 = arith.constant 1.000000e+00 : f32
    %24 = vector.broadcast %cst_18 : f32 to vector<1x4xf32>
    %25 = arith.addf %24, %17 : vector<1x4xf32>
    %26 = arith.divf %17, %25 : vector<1x4xf32>
    %27 = arith.select %19, %23, %26 : vector<1x4xi1>, vector<1x4xf32>
    %cst_19 = arith.constant 1.000000e+00 : f32
    %28 = vector.broadcast %cst_19 : f32 to vector<1x4xf32>
    %29 = arith.addf %27, %28 : vector<1x4xf32>
    %30 = vector.shape_cast %29 : vector<1x4xf32> to vector<1x4x1xf32>
    %31 = vector.broadcast %30 : vector<1x4x1xf32> to vector<1x4x16xf32>
    %32 = arith.mulf %0, %31 : vector<1x4x16xf32>
    %c0_20 = arith.constant 0 : index
    %c0_21 = arith.constant 0 : index
    %c0_22 = arith.constant 0 : index
    %33 = vector.load %arg6[%c0_20, %c0_21, %c0_22] : memref<1x4x16xf32, #tpu.memory_space<vmem>>, vector<1x4x16xf32>
    tpu.vector_store %arg6[%c0_20, %c0_21, %c0_22], %32 {strides = array<i32>} : memref<1x4x16xf32, #tpu.memory_space<vmem>>, vector<1x4x16xf32>,
    return
  }
  func.func @transform_0(%arg0: i32) -> (i32, i32, i32) {
    %c0_i32 = arith.constant 0 : i32
    %c0_i32_0 = arith.constant 0 : i32
    %c0_i32_1 = arith.constant 0 : i32
    return %arg0, %c0_i32, %c0_i32_0 : i32, i32, i32
  }
  func.func @transform_1(%arg0: i32) -> (i32, i32) {
    %c0_i32 = arith.constant 0 : i32
    %c0_i32_0 = arith.constant 0 : i32
    %c0_i32_1 = arith.constant 0 : i32
    return %c0_i32, %c0_i32_0 : i32, i32
  }
  func.func @transform_2(%arg0: i32) -> (i32, i32) {
    %c0_i32 = arith.constant 0 : i32
    %c0_i32_0 = arith.constant 0 : i32
    %c0_i32_1 = arith.constant 0 : i32
    return %c0_i32, %c0_i32_0 : i32, i32
  }
  func.func @transform_3(%arg0: i32) -> (i32, i32) {
    %c0_i32 = arith.constant 0 : i32
    %c0_i32_0 = arith.constant 0 : i32
    %c0_i32_1 = arith.constant 0 : i32
    return %c0_i32, %c0_i32_0 : i32, i32
  }
  func.func @transform_4(%arg0: i32) -> (i32, i32) {
    %c0_i32 = arith.constant 0 : i32
    %c0_i32_0 = arith.constant 0 : i32
    %c0_i32_1 = arith.constant 0 : i32
    return %c0_i32, %c0_i32_0 : i32, i32
  }
  func.func @transform_5(%arg0: i32) -> (i32, i32, i32) {
    %c0_i32 = arith.constant 0 : i32
    %c0_i32_0 = arith.constant 0 : i32
    %c0_i32_1 = arith.constant 0 : i32
    return %arg0, %c0_i32, %c0_i32_0 : i32, i32, i32
  }
}

</mosaic_0001>

<llo_original>
// kernel: tpu_custom_call.1
$region0: #{tpu_custom_call.1}
  #allocation0 [shape = 'u32[]', space=smem, size = 0x4, offset = 0x4, fixed_abs, tag = 'smem constant byte address 0x4 - core index']
  #allocation1 [shape = 'u32[144,128]{1,0:T(1,128)}', space=vmem, size = 0x12000, scoped, tag = 'internal scratch']
  %s0 = inlined_call_operand.hbm [shape: f32[2,4,16], index: 0, kind: input, shape index: {}, may-alias: {0,5}]
  %s1 = inlined_call_operand.vmem [shape: f32[4,30], index: 1, kind: input, shape index: {}]
  %s2 = inlined_call_operand.vmem [shape: f32[1,30], index: 2, kind: input, shape index: {}]
  %s3 = inlined_call_operand.vmem [shape: f32[30,4], index: 3, kind: input, shape index: {}]
  %s4 = inlined_call_operand.vmem [shape: f32[1,4], index: 4, kind: input, shape index: {}]
  %s5 = inlined_call_operand.hbm [shape: f32[2,4,16], index: 5, kind: output, shape index: {}, may-alias: {0,5}]
  %s6 = sld [smem:[#allocation0]]
  $region57: #{tpu_custom_call.1} parent=0
    _
  %s8 = ssub.s32 1, %s6
  %s9 = scalar_select 0, %s8, %s6
  $region1: #{tpu_custom_call.1} parent=0
    #allocation2 [shape = 'u8[4096]{0}', space=vmem, size = 0x1000, scoped, tag = 'input window, operand 0']
    #allocation3 [shape = 's32[2]{0}', space=sflag, size = 0x8, scoped, tag = 'scoped memory for tpu_custom_call.1']
    #allocation4 [shape = 's32[2]{0}', space=sflag, size = 0x8, scoped, tag = 'scoped memory for tpu_custom_call.1']
    #allocation5 [shape = 'u8[4096]{0}', space=vmem, size = 0x1000, scoped, tag = 'output window, operand 0']
    %10 = vsyncpa [#allocation3], 0
    %s11 = scalar_lea.sflag [#allocation3], 1
    %12 = vsyncpa %s11, 0
    %13 = vsyncpa [#allocation4], 0
    %s14 = scalar_lea.sflag [#allocation4], 1
    %15 = vsyncpa %s14, 0
    loop: start=0, step=1, limit=4
    $region2: #{tpu_custom_call.1} parent=1 // loop_pre_header
      _
    $region3: #{tpu_custom_call.1} parent=1 // loop_header
      %s17 = sphi 0, %s21
      %p18 = scmp.ge.s32.totalorder %s17, 4
      %s27 = sphi 0, %s29
      %s30 = sphi 0, %s27
      %s31 = sphi 0, %s30
      %s47 = sphi 0, %s31
      %s51 = sphi 0, %s51
      %s53 = sphi 0, %s51
      %s54 = sphi 0, %s53
      %s68 = sphi 0, %s54
      %s72 = sphi 0, %s72
      %s74 = sphi 0, %s72
      %s75 = sphi 0, %s74
      %s89 = sphi 0, %s75
      %s93 = sphi 0, %s93
      %s95 = sphi 0, %s93
      %s96 = sphi 0, %s95
      %s110 = sphi 0, %s96
      %s114 = sphi 0, %s114
      %s116 = sphi 0, %s114
      %s117 = sphi 0, %s116
      %s131 = sphi 0, %s117
      %s137 = sphi 0, %s139
      %s140 = sphi 0, %s137
      %s141 = sphi 0, %s140
      %s157 = sphi 0, %s141
    $region4: #{tpu_custom_call.1} parent=1 // loop_header_branch
      %20 = sbr.rel (%p18) target = $region8
    $region5: #{tpu_custom_call.1} parent=1 // loop_body
      %s22 = ssub.s32 %s17, 1
      %s23 = ssub.s32 %s17, 2
      %s24 = sadd.s32 %s17, 1
      %s25 = ssub.s32 %s17, %s24
      %p26 = scmp.eq.s32.totalorder %s25, 0
      %s28 = sadd.s32 %s27, 1
      %s29 = scalar_select %p26, %s27, %s28
      %p32 = pneg %p26
      %p33 = scmp.eq.s32.totalorder %s17, 1
      %p34 = por %p32, %p33
      %p35 = scmp.ne.s32.totalorder %s27, %s30
      %p36 = scmp.eq.s32.totalorder %s17, 0
      %p37 = por %p35, %p36
      %p38 = scmp.ne.s32.totalorder %s27, %s30
      %p39 = scmp.eq.s32.totalorder %s22, 1
      %p40 = por %p38, %p39
      %p41 = scmp.ne.s32.totalorder %s30, %s31
      %p42 = scmp.eq.s32.totalorder %s22, 0
      %p43 = por %p41, %p42
      %p44 = scmp.ne.s32.totalorder %s30, %s31
      %p45 = scmp.eq.s32.totalorder %s23, 1
      %p46 = por %p44, %p45
      %p48 = scmp.ne.s32.totalorder %s31, %s47
      %p49 = scmp.eq.s32.totalorder %s23, 0
      %p50 = por %p48, %p49
      %s52 = sadd.s32 %s51, 1
      %p55 = scmp.eq.s32.totalorder %s17, 1
      %p56 = scmp.ne.s32.totalorder %s51, %s53
      %p57 = scmp.eq.s32.totalorder %s17, 0
      %p58 = por %p56, %p57
      %p59 = scmp.ne.s32.totalorder %s51, %s53
      %p60 = scmp.eq.s32.totalorder %s22, 1
      %p61 = por %p59, %p60
      %p62 = scmp.ne.s32.totalorder %s53, %s54
      %p63 = scmp.eq.s32.totalorder %s22, 0
      %p64 = por %p62, %p63
      %p65 = scmp.ne.s32.totalorder %s53, %s54
      %p66 = scmp.eq.s32.totalorder %s23, 1
      %p67 = por %p65, %p66
      %p69 = scmp.ne.s32.totalorder %s54, %s68
      %p70 = scmp.eq.s32.totalorder %s23, 0
      %p71 = por %p69, %p70
      %s73 = sadd.s32 %s72, 1
      %p76 = scmp.eq.s32.totalorder %s17, 1
      %p77 = scmp.ne.s32.totalorder %s72, %s74
      %p78 = scmp.eq.s32.totalorder %s17, 0
      %p79 = por %p77, %p78
      %p80 = scmp.ne.s32.totalorder %s72, %s74
      %p81 = scmp.eq.s32.totalorder %s22, 1
      %p82 = por %p80, %p81
      %p83 = scmp.ne.s32.totalorder %s74, %s75
      %p84 = scmp.eq.s32.totalorder %s22, 0
      %p85 = por %p83, %p84
      %p86 = scmp.ne.s32.totalorder %s74, %s75
      %p87 = scmp.eq.s32.totalorder %s23, 1
      %p88 = por %p86, %p87
      %p90 = scmp.ne.s32.totalorder %s75, %s89
      %p91 = scmp.eq.s32.totalorder %s23, 0
      %p92 = por %p90, %p91
      %s94 = sadd.s32 %s93, 1
      %p97 = scmp.eq.s32.totalorder %s17, 1
      %p98 = scmp.ne.s32.totalorder %s93, %s95
      %p99 = scmp.eq.s32.totalorder %s17, 0
      %p100 = por %p98, %p99
      %p101 = scmp.ne.s32.totalorder %s93, %s95
      %p102 = scmp.eq.s32.totalorder %s22, 1
      %p103 = por %p101, %p102
      %p104 = scmp.ne.s32.totalorder %s95, %s96
      %p105 = scmp.eq.s32.totalorder %s22, 0
      %p106 = por %p104, %p105
      %p107 = scmp.ne.s32.totalorder %s95, %s96
      %p108 = scmp.eq.s32.totalorder %s23, 1
      %p109 = por %p107, %p108
      %p111 = scmp.ne.s32.totalorder %s96, %s110
      %p112 = scmp.eq.s32.totalorder %s23, 0
      %p113 = por %p111, %p112
      %s115 = sadd.s32 %s114, 1
      %p118 = scmp.eq.s32.totalorder %s17, 1
      %p119 = scmp.ne.s32.totalorder %s114, %s116
      %p120 = scmp.eq.s32.totalorder %s17, 0
      %p121 = por %p119, %p120
      %p122 = scmp.ne.s32.totalorder %s114, %s116
      %p123 = scmp.eq.s32.totalorder %s22, 1
      %p124 = por %p122, %p123
      %p125 = scmp.ne.s32.totalorder %s116, %s117
      %p126 = scmp.eq.s32.totalorder %s22, 0
      %p127 = por %p125, %p126
      %p128 = scmp.ne.s32.totalorder %s116, %s117
      %p129 = scmp.eq.s32.totalorder %s23, 1
      %p130 = por %p128, %p129
      %p132 = scmp.ne.s32.totalorder %s117, %s131
      %p133 = scmp.eq.s32.totalorder %s23, 0
      %p134 = por %p132, %p133
      %s135 = ssub.s32 %s17, %s24
      %p136 = scmp.eq.s32.totalorder %s135, 0
      %s138 = sadd.s32 %s137, 1
      %s139 = scalar_select %p136, %s137, %s138
      %p142 = pneg %p136
      %p143 = scmp.eq.s32.totalorder %s17, 1
      %p144 = por %p142, %p143
      %p145 = scmp.ne.s32.totalorder %s137, %s140
      %p146 = scmp.eq.s32.totalorder %s17, 0
      %p147 = por %p145, %p146
      %p148 = scmp.ne.s32.totalorder %s137, %s140
      %p149 = scmp.eq.s32.totalorder %s22, 1
      %p150 = por %p148, %p149
      %p151 = scmp.ne.s32.totalorder %s140, %s141
      %p152 = scmp.eq.s32.totalorder %s22, 0
      %p153 = por %p151, %p152
      %p154 = scmp.ne.s32.totalorder %s140, %s141
      %p155 = scmp.eq.s32.totalorder %s23, 1
      %p156 = por %p154, %p155
      %p158 = scmp.ne.s32.totalorder %s141, %s157
      %p159 = scmp.eq.s32.totalorder %s23, 0
      %p160 = por %p158, %p159
      %p161 = scmp.le.s32.totalorder 1, %s17
      %p162 = scmp.lt.s32.totalorder %s17, 3
      %p163 = pnand %p161, %p162
      %p164 = pneg %p163
      // Predicated region
      $region9: #{tpu_custom_call.1} parent=5 // pred_check
        _
      $region10: #{tpu_custom_call.1} parent=5 // pred_check_branch
        %166 = sbr.rel (%p163) target = $region12
      $region11: #{tpu_custom_call.1} parent=5 // pred_region
        %s167 = ssub.s32 %s17, 1
        // Predicated region
        $region13: #{tpu_custom_call.1} parent=11 // pred_check
          %p168 = pneg %p64
        $region14: #{tpu_custom_call.1} parent=11 // pred_check_branch
          %170 = sbr.rel (%p168) target = $region16
        $region15: #{tpu_custom_call.1} parent=11 // pred_region
          _
        $region16: #{tpu_custom_call.1} parent=11 // pred_fallthru
          _
        // Predicated region
        $region17: #{tpu_custom_call.1} parent=11 // pred_check
          %p171 = pneg %p85
        $region18: #{tpu_custom_call.1} parent=11 // pred_check_branch
          %173 = sbr.rel (%p171) target = $region20
        $region19: #{tpu_custom_call.1} parent=11 // pred_region
          _
        $region20: #{tpu_custom_call.1} parent=11 // pred_fallthru
          _
        // Predicated region
        $region21: #{tpu_custom_call.1} parent=11 // pred_check
          %p174 = pneg %p106
        $region22: #{tpu_custom_call.1} parent=11 // pred_check_branch
          %176 = sbr.rel (%p174) target = $region24
        $region23: #{tpu_custom_call.1} parent=11 // pred_region
          _
        $region24: #{tpu_custom_call.1} parent=11 // pred_fallthru
          _
        // Predicated region
        $region25: #{tpu_custom_call.1} parent=11 // pred_check
          %p177 = pneg %p127
        $region26: #{tpu_custom_call.1} parent=11 // pred_check_branch
          %179 = sbr.rel (%p177) target = $region28
        $region27: #{tpu_custom_call.1} parent=11 // pred_region
          _
        $region28: #{tpu_custom_call.1} parent=11 // pred_fallthru
          _
      $region12: #{tpu_custom_call.1} parent=5 // pred_fallthru
        _
      %p180 = scmp.lt.s32.totalorder %s17, 2
      // Predicated region
      $region29: #{tpu_custom_call.1} parent=5 // pred_check
        %p181 = pneg %p180
      $region30: #{tpu_custom_call.1} parent=5 // pred_check_branch
        %183 = sbr.rel (%p181) target = $region32
      $region31: #{tpu_custom_call.1} parent=5 // pred_region
        // Predicated region
        $region33: #{tpu_custom_call.1} parent=31 // pred_check
          %p184 = pneg %p37
        $region34: #{tpu_custom_call.1} parent=31 // pred_check_branch
          %186 = sbr.rel (%p184) target = $region36
        $region35: #{tpu_custom_call.1} parent=31 // pred_region
          %s187 = sand.u32 %s27, 1
          %s188 = scalar_lea.sflag [#allocation3], %s187
          %s189 = sand.u32 %s27, 1
          %s190 = smul.addr %s189, 4
          %s191 = scalar_lea.vmem [#allocation2], %s190
          %s193 = ssub.s32 64, 64
          %194 = vsyncadd %s188, %s193
          %s195 = smul.addr %s17, 64
          %s196 = scalar_lea.hbm %s0, %s195
          %s198 = sshll.u32 %s191, 4
          %s199 = int_to_ptr.vmem [resolvable:$true] %s198
          %201 = dma.hbm_to_vmem [thread:$0]  %s196, 64, %s199, %s188
        $region36: #{tpu_custom_call.1} parent=31 // pred_fallthru
          _
      $region32: #{tpu_custom_call.1} parent=5 // pred_fallthru
        _
      %p202 = scmp.le.s32.totalorder 1, %s17
      %p203 = scmp.lt.s32.totalorder %s17, 3
      %p204 = pnand %p202, %p203
      %p205 = pneg %p204
      // Predicated region
      $region37: #{tpu_custom_call.1} parent=5 // pred_check
        _
      $region38: #{tpu_custom_call.1} parent=5 // pred_check_branch
        %207 = sbr.rel (%p204) target = $region40
      $region39: #{tpu_custom_call.1} parent=5 // pred_region
        %s208 = ssub.s32 %s17, 1
        %s209 = sand.u32 %s30, 1
        %s210 = scalar_lea.sflag [#allocation3], %s209
        %s211 = sand.u32 %s30, 1
        %s212 = smul.addr %s211, 4
        %s213 = scalar_lea.vmem [#allocation2], %s212
        // Predicated region
        $region41: #{tpu_custom_call.1} parent=39 // pred_check
          %p214 = pneg %p43
        $region42: #{tpu_custom_call.1} parent=39 // pred_check_branch
          %216 = sbr.rel (%p214) target = $region44
        $region43: #{tpu_custom_call.1} parent=39 // pred_region
          %217 = dma.done %s210, 64
        $region44: #{tpu_custom_call.1} parent=39 // pred_fallthru
          _
        %s218 = sand.u32 %s30, 1
        %s219 = scalar_lea.sflag [#allocation3], %s218
        %s220 = sand.u32 %s30, 1
        %s221 = smul.addr %s220, 4
        %s222 = scalar_lea.vmem [#allocation2], %s221
        %p223 = pneg %p43
        %p224 = pneg %p40
        %p225 = pneg %p64
        %p226 = pneg %p61
        %p227 = pneg %p85
        %p228 = pneg %p82
        %p229 = pneg %p106
        %p230 = pneg %p103
        %p231 = pneg %p127
        %p232 = pneg %p124
        %p233 = pneg %p153
        %p234 = pneg %p150
        %s235 = sand.u32 %s140, 1
        %s236 = scalar_lea.sflag [#allocation4], %s235
        %s237 = sand.u32 %s140, 1
        %s238 = smul.addr %s237, 4
        %s239 = scalar_lea.vmem [#allocation5], %s238
        %v240 = vld [vmem:[%s213] sm:$0xf]
        %vm241 = vcmask 125952
        %v242 = vsel %vm241, %v240, 0.0
        %243 = vadd.xlane.f32.xlu0 %v242
        %v244 = vpop.xlane.xlu0 %243
        %v245 = vmul.f32 %v244, 0.0625
        %v246 = vld [vmem:[%s1] sm:$0xf]
        %v247 = vld [vmem:[%s2] sm:$0x1]
        %v249 = vlaneseq
        %v250 = vand.u32 %v249, 127
        %v251 = vlaneseq
        %v252 = vshrl.u32 %v251, 7
        %v253 = vsub.s32 %v250, %v252
        %v254 = vrot.slane %v245, %v253
        %vm255 = vcmask 31744
        %v256 = vsel %vm255, %v254, 0
        %vm258 = vcmask 1043456
        %v260 = vsel %vm258, %v246, 0
        %262 = vmatprep.subr.mxu0 0.0
        %263 = vmatpush1.msra.mxu0 %v260
        %264 = vmatprep.subr.mxu0 0.0
        %265 = vmatpush1.msra.mxu0 0.0
        %266 = vmatprep.subr.mxu0 0.0
        %267 = vmatpush1.msra.mxu0 0.0
        %268 = vmatprep.subr.mxu0 0.0
        %269 = vmatpush1.msra.mxu0 0.0
        %270 = vmatprep.subr.mxu0 0.0
        %271 = vmatpush1.msra.mxu0 0.0
        %272 = vmatprep.subr.mxu0 0.0
        %273 = vmatpush1.msra.mxu0 0.0
        %274 = vmatprep.subr.mxu0 0.0
        %275 = vmatpush1.msra.mxu0 0.0
        %276 = vmatprep.subr.mxu0 0.0
        %277 = vmatpush1.msra.mxu0 0.0
        %278 = vmatprep.subr.mxu0 0.0
        %279 = vmatpush1.msra.mxu0 0.0
        %280 = vmatprep.subr.mxu0 0.0
        %281 = vmatpush1.msra.mxu0 0.0
        %282 = vmatprep.subr.mxu0 0.0
        %283 = vmatpush1.msra.mxu0 0.0
        %284 = vmatprep.subr.mxu0 0.0
        %285 = vmatpush1.msra.mxu0 0.0
        %286 = vmatprep.subr.mxu0 0.0
        %287 = vmatpush1.msra.mxu0 0.0
        %288 = vmatprep.subr.mxu0 0.0
        %289 = vmatpush1.msra.mxu0 0.0
        %290 = vmatprep.subr.mxu0 0.0
        %291 = vmatpush1.msra.mxu0 0.0
        %292 = vmatprep.subr.mxu0 0.0
        %293 = vmatpush1.msra.mxu0 0.0
        %294 = vmatprep.subr.mxu0 0.0
        %295 = vmatpush1.msra.mxu0 0.0
        %296 = vmatprep.subr.mxu0 0.0
        %297 = vmatpush1.msra.mxu0 0.0
        %298 = vmatprep.subr.mxu0 0.0
        %299 = vmatpush1.msra.mxu0 0.0
        %300 = vmatprep.subr.mxu0 0.0
        %301 = vmatpush1.msra.mxu0 0.0
        %302 = vmatprep.subr.mxu0 0.0
        %303 = vmatpush1.msra.mxu0 0.0
        %304 = vmatprep.subr.mxu0 0.0
        %305 = vmatpush1.msra.mxu0 0.0
        %306 = vmatprep.subr.mxu0 0.0
        %307 = vmatpush1.msra.mxu0 0.0
        %308 = vmatprep.subr.mxu0 0.0
        %309 = vmatpush1.msra.mxu0 0.0
        %310 = vmatprep.subr.mxu0 0.0
        %311 = vmatpush1.msra.mxu0 0.0
        %312 = vmatprep.subr.mxu0 0.0
        %313 = vmatpush1.msra.mxu0 0.0
        %314 = vmatprep.subr.mxu0 0.0
        %315 = vmatpush1.msra.mxu0 0.0
        %316 = vmatprep.subr.mxu0 0.0
        %317 = vmatpush1.msra.mxu0 0.0
        %318 = vmatprep.subr.mxu0 0.0
        %319 = vmatpush1.msra.mxu0 0.0
        %320 = vmatprep.subr.mxu0 0.0
        %321 = vmatpush1.msra.mxu0 0.0
        %322 = vmatprep.subr.mxu0 0.0
        %323 = vmatpush1.msra.mxu0 0.0
        %324 = vmatprep.subr.mxu0 0.0
        %325 = vmatpush1.msra.mxu0 0.0
        %326 = vmatprep.mubr.f32.mxu0 0.0
        %327 = vmatmul.mubr.f32.gmra.mrb[0].mxu0 %v256
        %v328 = vpop.f32.mrb[0].mxu0
        %v329 = vadd.f32 %v247, %v328
        %v330 = vpop.f32.mrb[0].mxu0
        %331 = vdwg.mxu0
        %v332 = vmax.f32 %v329, 0.0
        %v333 = vld [vmem:[%s3] sm:$0xff]
        %v334 = vld [vmem:[%s3 + $0x8] sm:$0xff]
        %v335 = vld [vmem:[%s3 + $0x10] sm:$0xff]
        %v336 = vld [vmem:[%s3 + $0x18] sm:$0x3f]
        %v337 = vld [vmem:[%s4] sm:$0x1]
        %vm338 = vcmask 244736
        %v340 = vsel %vm338, %v332, 0
        %vm342 = vcmask 1045504
        %v344 = vsel %vm342, %v336, 0
        %346 = vmatprep.subr.mxu0 0.0
        %347 = vmatpush1.msra.mxu0 %v333
        %348 = vmatprep.subr.mxu0 0.0
        %349 = vmatpush1.msra.mxu0 %v334
        %350 = vmatprep.subr.mxu0 0.0
        %351 = vmatpush1.msra.mxu0 %v335
        %352 = vmatprep.subr.mxu0 0.0
        %353 = vmatpush1.msra.mxu0 %v344
        %354 = vmatprep.subr.mxu0 0.0
        %355 = vmatpush1.msra.mxu0 0.0
        %356 = vmatprep.subr.mxu0 0.0
        %357 = vmatpush1.msra.mxu0 0.0
        %358 = vmatprep.subr.mxu0 0.0
        %359 = vmatpush1.msra.mxu0 0.0
        %360 = vmatprep.subr.mxu0 0.0
        %361 = vmatpush1.msra.mxu0 0.0
        %362 = vmatprep.subr.mxu0 0.0
        %363 = vmatpush1.msra.mxu0 0.0
        %364 = vmatprep.subr.mxu0 0.0
        %365 = vmatpush1.msra.mxu0 0.0
        %366 = vmatprep.subr.mxu0 0.0
        %367 = vmatpush1.msra.mxu0 0.0
        %368 = vmatprep.subr.mxu0 0.0
        %369 = vmatpush1.msra.mxu0 0.0
        %370 = vmatprep.subr.mxu0 0.0
        %371 = vmatpush1.msra.mxu0 0.0
        %372 = vmatprep.subr.mxu0 0.0
        %373 = vmatpush1.msra.mxu0 0.0
        %374 = vmatprep.subr.mxu0 0.0
        %375 = vmatpush1.msra.mxu0 0.0
        %376 = vmatprep.subr.mxu0 0.0
        %377 = vmatpush1.msra.mxu0 0.0
        %378 = vmatprep.subr.mxu0 0.0
        %379 = vmatpush1.msra.mxu0 0.0
        %380 = vmatprep.subr.mxu0 0.0
        %381 = vmatpush1.msra.mxu0 0.0
        %382 = vmatprep.subr.mxu0 0.0
        %383 = vmatpush1.msra.mxu0 0.0
        %384 = vmatprep.subr.mxu0 0.0
        %385 = vmatpush1.msra.mxu0 0.0
        %386 = vmatprep.subr.mxu0 0.0
        %387 = vmatpush1.msra.mxu0 0.0
        %388 = vmatprep.subr.mxu0 0.0
        %389 = vmatpush1.msra.mxu0 0.0
        %390 = vmatprep.subr.mxu0 0.0
        %391 = vmatpush1.msra.mxu0 0.0
        %392 = vmatprep.subr.mxu0 0.0
        %393 = vmatpush1.msra.mxu0 0.0
        %394 = vmatprep.subr.mxu0 0.0
        %395 = vmatpush1.msra.mxu0 0.0
        %396 = vmatprep.subr.mxu0 0.0
        %397 = vmatpush1.msra.mxu0 0.0
        %398 = vmatprep.subr.mxu0 0.0
        %399 = vmatpush1.msra.mxu0 0.0
        %400 = vmatprep.subr.mxu0 0.0
        %401 = vmatpush1.msra.mxu0 0.0
        %402 = vmatprep.subr.mxu0 0.0
        %403 = vmatpush1.msra.mxu0 0.0
        %404 = vmatprep.subr.mxu0 0.0
        %405 = vmatpush1.msra.mxu0 0.0
        %406 = vmatprep.subr.mxu0 0.0
        %407 = vmatpush1.msra.mxu0 0.0
        %408 = vmatprep.subr.mxu0 0.0
        %409 = vmatpush1.msra.mxu0 0.0
        %410 = vmatprep.mubr.f32.mxu0 0.0
        %411 = vmatmul.mubr.f32.gmra.mrb[0].mxu0 %v340
        %v412 = vpop.f32.mrb[0].mxu0
        %v413 = vadd.f32 %v337, %v412
        %v414 = vpop.f32.mrb[0].mxu0
        %415 = vdwg.mxu0
        %v416 = vand.u32 2147483647, %v413
        %v417 = vsub.f32 0.0, %v416
        %v418 = vmul.f32 %v417, 1.442695
        %v419 = vpow.pop %v418
        %vm420 = vcmp.ge.f32.partialorder %v413, 0.0
        %v421 = vadd.f32 %v419, 1.0
        %v422 = vrcp.pop %v421
        %v423 = vmul.f32 1.0, %v422
        %v424 = vmul.f32 %v419, %v422
        %v425 = vsel %vm420, %v423, %v424
        %v426 = vadd.f32 %v425, 1.0
        %v427 = vlaneseq
        %v428 = vshrl.u32 %v427, 7
        %v429 = vsub.s32 0, %v428
        %v430 = vrot.slane %v426, %v429
        %432 = vbcast.lane.b32.xlu0 %v430, 256
        %v433 = vpop.permute.xlu0 %432
        %v434 = vmul.f32 %v240, %v433
        %435 = vst.msk [vmem:[%s239] sm:$0xf] %vm241, %v434
        %s436 = sand.u32 %s140, 1
        %s437 = scalar_lea.sflag [#allocation4], %s436
        %s438 = sand.u32 %s140, 1
        %s439 = smul.addr %s438, 4
        %s440 = scalar_lea.vmem [#allocation5], %s439
        // Predicated region
        $region45: #{tpu_custom_call.1} parent=39 // pred_check
          %p441 = pneg %p150
        $region46: #{tpu_custom_call.1} parent=39 // pred_check_branch
          %443 = sbr.rel (%p441) target = $region48
        $region47: #{tpu_custom_call.1} parent=39 // pred_region
          %s445 = ssub.s32 64, 64
          %446 = vsyncadd %s437, %s445
          %s447 = smul.addr %s22, 64
          %s448 = scalar_lea.hbm %s5, %s447
          %s450 = sshll.u32 %s440, 4
          %s451 = int_to_ptr.vmem [resolvable:$true] %s450
          %453 = dma.vmem_to_hbm [thread:$0]  %s451, 64, %s448, %s437
        $region48: #{tpu_custom_call.1} parent=39 // pred_fallthru
          _
      $region40: #{tpu_custom_call.1} parent=5 // pred_fallthru
        _
      %p454 = scmp.le.s32.totalorder 2, %s17
      // Predicated region
      $region49: #{tpu_custom_call.1} parent=5 // pred_check
        %p455 = pneg %p454
      $region50: #{tpu_custom_call.1} parent=5 // pred_check_branch
        %457 = sbr.rel (%p455) target = $region52
      $region51: #{tpu_custom_call.1} parent=5 // pred_region
        %s458 = ssub.s32 %s17, 2
        // Predicated region
        $region53: #{tpu_custom_call.1} parent=51 // pred_check
          %p459 = pneg %p156
        $region54: #{tpu_custom_call.1} parent=51 // pred_check_branch
          %461 = sbr.rel (%p459) target = $region56
        $region55: #{tpu_custom_call.1} parent=51 // pred_region
          %s462 = sand.u32 %s141, 1
          %s463 = scalar_lea.sflag [#allocation4], %s462
          %s464 = sand.u32 %s141, 1
          %s465 = smul.addr %s464, 4
          %s466 = scalar_lea.vmem [#allocation5], %s465
          %467 = dma.done %s463, 64
        $region56: #{tpu_custom_call.1} parent=51 // pred_fallthru
          _
      $region52: #{tpu_custom_call.1} parent=5 // pred_fallthru
        _
    $region6: #{tpu_custom_call.1} parent=1 // loop_footer
      %s21 = sadd.s32 1, %s17
    $region7: #{tpu_custom_call.1} parent=1 // loop_footer_branch
      %16 = sbr.rel target = $region3
    $region8: #{tpu_custom_call.1} parent=1 // loop_exit
      _
    %468 = vsyncpa [#allocation3], 1
    %s469 = scalar_lea.sflag [#allocation3], 1
    %470 = vsyncpa %s469, 1
    %471 = vsyncpa [#allocation4], 1
    %s472 = scalar_lea.sflag [#allocation4], 1
    %473 = vsyncpa %s472, 1

</llo_original>
